<compile_context>
chip_gen: v5e
topology: v5e:2x2
jax: 0.10.0
libtpu: 0.0.40
codegen_flags: <defaults>
</compile_context>

<pallas_src>
import functools
import math

import jax
import jax.numpy as jnp
from jax import lax
from jax.experimental import pallas as pl
from jax.experimental.pallas import tpu as pltpu

_LANE = 128


def _round_up(x: int, m: int) -> int:
    return ((x + m - 1) // m) * m


def _self_attention_kernel(q_ref, kv_ref, out_ref, attn_ref, *,
                           d_orig: int, s_orig: int, s_pad: int):
    # q_ref    : (1, TQ, Dp)  query tile            (io dtype)
    # kv_ref   : (1, Sp, Dp)  full keys/values      (io dtype, grid-invariant)
    # out_ref  : (1, TQ, Dp)
    # attn_ref : (1, TQ, Sp)
    inv_sqrt_dk = 1.0 / math.sqrt(float(d_orig))

    # Fold 1/sqrt(d_k) into the small (TQ, Dp) Q tile; keep operands in the
    # input dtype so bf16 inputs hit the MXU at full rate.
    q = q_ref[0] * jnp.asarray(inv_sqrt_dk, dtype=q_ref.dtype)       # (TQ, Dp)
    kv = kv_ref[0]                                                   # (Sp, Dp)

    # scores = (Q/sqrt(d_k)) @ K^T, contracting on the feature dim directly
    # (transpose absorbed into the MXU); accumulate in f32.
    scores = lax.dot_general(
        q, kv,
        dimension_numbers=(((1,), (1,)), ((), ())),
        preferred_element_type=jnp.float32,
    )                                                                # (TQ, Sp)

    # Mask padded key columns (only emitted when S was padded).
    if s_pad != s_orig:
        key_idx = lax.broadcasted_iota(jnp.int32, scores.shape, 1)
        scores = jnp.where(key_idx < s_orig, scores, jnp.float32(-1e30))

    # Numerically-stable softmax along the key axis, in f32.
    m = jnp.max(scores, axis=-1, keepdims=True)
    e = jnp.exp(scores - m)
    denom = jnp.sum(e, axis=-1, keepdims=True)
    r = pl.reciprocal(denom, approx=True)        # EUP slot (free)
    r = r * (2.0 - denom * r)                    # one Newton step -> ~f32 exact
    weights = e * r                              # (TQ, Sp) f32

    # output = weights @ V on the MXU; weights cast to KV dtype (no f32 upcast
    # of the invariant KV tile).
    out = jnp.dot(weights.astype(kv.dtype), kv,
                  preferred_element_type=jnp.float32)                # (TQ, Dp)

    out_ref[0] = out.astype(out_ref.dtype)
    attn_ref[0] = weights.astype(attn_ref.dtype)


def _vmem_bytes(tq: int, s_pad: int, d_pad: int,
                io_itemsize: int, w_itemsize: int) -> int:
    # Double-buffered Q and out tiles + double-buffered attn tile.
    dbuf = 2 * io_itemsize * (2 * tq * d_pad) + 2 * w_itemsize * (tq * s_pad)
    # KV block: grid-invariant but conservatively count it double-buffered.
    kv = 2 * io_itemsize * (s_pad * d_pad)
    # f32 compute temporaries: scores / e / weights (~3 * TQ * Sp) + out acc.
    tmp = 4 * (3 * tq * s_pad + tq * d_pad)
    return dbuf + kv + tmp


def _vmem_budget():
    """(tile budget, physical capacity) for the current chip generation."""
    try:
        cap = int(pltpu.get_tpu_info().vmem_capacity_bytes)
    except Exception:  # pragma: no cover - conservative (v7x-sized) fallback
        cap = 64 << 20
    budget = max(min(int(cap * 0.7), cap - (16 << 20)), 12 << 20)
    return budget, cap


def _pick_tq(s_pad: int, d_pad: int, io_itemsize: int, w_itemsize: int,
             budget: int) -> int:
    """Largest q-tile in {512, 256, 128} dividing Sp that fits the budget."""
    for tq in (512, 256, 128):
        if s_pad % tq == 0 and _vmem_bytes(tq, s_pad, d_pad,
                                           io_itemsize, w_itemsize) <= budget:
            return tq
    # TODO(synk): key-axis tiling (online softmax) instead of going below 128.
    return 128


def self_attention(volume: jax.Array, weights_dtype=None):
    """volume: [B, S, D] -> (output [B,S,D], weights [B,S,S]).

    `weights_dtype` lets HBM-bound callers request bf16 attention weights
    (the dominant write stream); default keeps the input dtype (PyTorch
    semantics).
    """
    B, S, D = volume.shape
    io_dtype = jnp.dtype(volume.dtype)
    w_dtype = io_dtype if weights_dtype is None else jnp.dtype(weights_dtype)

    # Lane-dense padding of the feature and sequence dims.
    s_pad = _round_up(S, _LANE)
    d_pad = _round_up(D, _LANE)
    x = volume
    if (s_pad, d_pad) != (S, D):
        x = jnp.pad(volume, ((0, 0), (0, s_pad - S), (0, d_pad - D)))

    budget, cap = _vmem_budget()
    tq = _pick_tq(s_pad, d_pad, io_dtype.itemsize, w_dtype.itemsize, budget)
    n_q_tiles = s_pad // tq

    kernel = functools.partial(
        _self_attention_kernel, d_orig=D, s_orig=S, s_pad=s_pad)

    out_shape = (
        jax.ShapeDtypeStruct((B, s_pad, d_pad), io_dtype),
        jax.ShapeDtypeStruct((B, s_pad, s_pad), w_dtype),
    )

    grid_spec = pltpu.PrefetchScalarGridSpec(
        num_scalar_prefetch=0,
        grid=(B, n_q_tiles),
        in_specs=[
            # Q tile: advances with the q-tile axis.
            pl.BlockSpec((1, tq, d_pad), lambda b, qi: (b, qi, 0)),
            # K/V: full (padded) sequence, invariant in the q-tile axis so the
            # DMA is reused across q tiles of the same batch element.
            pl.BlockSpec((1, s_pad, d_pad), lambda b, qi: (b, 0, 0)),
        ],
        out_specs=[
            pl.BlockSpec((1, tq, d_pad), lambda b, qi: (b, qi, 0)),
            pl.BlockSpec((1, tq, s_pad), lambda b, qi: (b, qi, 0)),
        ],
    )

    # Raise the scoped-VMEM limit whenever the (temporaries-inclusive) estimate
    # exceeds the smallest per-chip default (v5e's 16 MiB), with real headroom.
    est_vmem = _vmem_bytes(tq, s_pad, d_pad, io_dtype.itemsize, w_dtype.itemsize)
    vmem_limit = None
    if est_vmem > (14 << 20):
        vmem_limit = int(min(cap, max(int(est_vmem * 1.3),
                                      est_vmem + (8 << 20))))

    # Batch axis "parallel" (v7x megacore shards batches -> KV DMA reuse holds
    # per core); q-tile axis "arbitrary".  If B == 1, let q-tiles shard instead.
    dims = ("parallel", "arbitrary") if B >= 2 else ("arbitrary", "parallel")

    cost = pl.CostEstimate(
        flops=int(4 * B * s_pad * s_pad * d_pad),          # QK^T + weights@V
        transcendentals=int(B * s_pad * s_pad),            # exp in softmax
        bytes_accessed=int(io_dtype.itemsize * B * 3 * s_pad * d_pad
                           + w_dtype.itemsize * B * s_pad * s_pad),
    )

    out_p, attn_p = pl.pallas_call(
        kernel,
        out_shape=out_shape,
        grid_spec=grid_spec,
        compiler_params=pltpu.CompilerParams(
            dimension_semantics=dims,
            vmem_limit_bytes=vmem_limit,
        ),
        cost_estimate=cost,
    )(x, x)

    # Slice padded rows/cols back off.
    out = out_p[:, :S, :D]
    attn = attn_p[:, :S, :S]
    return out, attn


def _reference(volume):
    d_k = volume.shape[-1]
    scores = jnp.einsum("bsd,btd->bst", volume, volume) / jnp.sqrt(
        jnp.float32(d_k))
    weights = jax.nn.softmax(scores, axis=-1)
    out = jnp.einsum("bst,btd->bsd", weights, volume)
    return out, weights


if __name__ == "__main__":
    key = jax.random.PRNGKey(0)
    B, S, D = 2, 8, 32
    volume = jax.random.normal(key, (B, S, D), dtype=jnp.float32)

    out, attn = self_attention(volume)
    jax.block_until_ready((out, attn))

    ref_out, ref_attn = _reference(volume)
    assert out.shape == (B, S, D) and attn.shape == (B, S, S)
    assert jnp.allclose(out, ref_out, atol=1e-5, rtol=1e-5), "output mismatch"
    assert jnp.allclose(attn, ref_attn, atol=1e-5, rtol=1e-5), "weights mismatch"

    print("KERNEL_OK")
</pallas_src>

<mosaic_0001>
module attributes {stable_mosaic.version = 11 : i64} {
  func.func @_self_attention_kernel(%arg0: i32, %arg1: i32, %arg2: memref<1x128x128xf32, #tpu.memory_space<vmem>>, %arg3: memref<1x128x128xf32, #tpu.memory_space<vmem>>, %arg4: memref<1x128x128xf32, #tpu.memory_space<vmem>>, %arg5: memref<1x128x128xf32, #tpu.memory_space<vmem>>) attributes {dimension_semantics = [#tpu.dimension_semantics<parallel>, #tpu.dimension_semantics<arbitrary>], iteration_bounds = array<i64: 2, 1>, scalar_prefetch = 0 : i64, scratch_operands = 0 : i64, tpu.core_type = #tpu.core_type<tc>, window_params = [{transform_indices = @transform_0, window_bounds = array<i64: 1, 128, 128>}, {transform_indices = @transform_1, window_bounds = array<i64: 1, 128, 128>}, {transform_indices = @transform_2, window_bounds = array<i64: 1, 128, 128>}, {transform_indices = @transform_3, window_bounds = array<i64: 1, 128, 128>}]} {
    %c0 = arith.constant 0 : index
    %c0_0 = arith.constant 0 : index
    %c0_1 = arith.constant 0 : index
    %0 = vector.load %arg2[%c0, %c0_0, %c0_1] : memref<1x128x128xf32, #tpu.memory_space<vmem>>, vector<1x128x128xf32>
    %1 = vector.shape_cast %0 : vector<1x128x128xf32> to vector<128x128xf32>
    %cst = arith.constant 0.176776692 : f32
    %2 = vector.broadcast %cst : f32 to vector<128x128xf32>
    %3 = arith.mulf %1, %2 : vector<128x128xf32>
    %c0_2 = arith.constant 0 : index
    %c0_3 = arith.constant 0 : index
    %c0_4 = arith.constant 0 : index
    %4 = vector.load %arg3[%c0_2, %c0_3, %c0_4] : memref<1x128x128xf32, #tpu.memory_space<vmem>>, vector<1x128x128xf32>
    %5 = vector.shape_cast %4 : vector<1x128x128xf32> to vector<128x128xf32>
    %cst_5 = arith.constant dense<0.000000e+00> : vector<128x128xf32>
    %6 = tpu.matmul %3, %5, %cst_5 {dimension_numbers = #tpu.dot_dimension_numbers<[1], [1], [0], [0], [0, 0, 1, 0], [], []>} : vector<128x128xf32>, vector<128x128xf32>, vector<128x128xf32> -> vector<128x128xf32>
    %7 = tpu.iota {dimensions = array<i32: 1>} : vector<128x128xi32>
    %c8_i32 = arith.constant 8 : i32
    %8 = vector.broadcast %c8_i32 : i32 to vector<128x128xi32>
    %9 = arith.cmpi slt, %7, %8 : vector<128x128xi32>
    %cst_6 = arith.constant -1.000000e+30 : f32
    %10 = vector.broadcast %cst_6 : f32 to vector<128x128xf32>
    %11 = arith.select %9, %6, %10 : vector<128x128xi1>, vector<128x128xf32>
    %cst_7 = arith.constant dense<0xFF800000> : vector<128xf32>
    %12 = vector.multi_reduction <maximumf>, %11, %cst_7 [1] : vector<128x128xf32> to vector<128xf32>
    %13 = vector.shape_cast %12 : vector<128xf32> to vector<128x1xf32>
    %14 = vector.broadcast %13 : vector<128x1xf32> to vector<128x128xf32>
    %15 = arith.subf %11, %14 : vector<128x128xf32>
    %16 = math.exp %15 : vector<128x128xf32>
    %cst_8 = arith.constant dense<0.000000e+00> : vector<128xf32>
    %17 = vector.multi_reduction <add>, %16, %cst_8 [1] : vector<128x128xf32> to vector<128xf32>
    %18 = vector.shape_cast %17 : vector<128xf32> to vector<128x1xf32>
    %19 = tpu.reciprocal %18 {approx = true} : vector<128x1xf32> -> vector<128x1xf32>
    %20 = arith.mulf %18, %19 : vector<128x1xf32>
    %cst_9 = arith.constant 2.000000e+00 : f32
    %21 = vector.broadcast %cst_9 : f32 to vector<128x1xf32>
    %22 = arith.subf %21, %20 : vector<128x1xf32>
    %23 = arith.mulf %19, %22 : vector<128x1xf32>
    %24 = vector.broadcast %23 : vector<128x1xf32> to vector<128x128xf32>
    %25 = arith.mulf %16, %24 : vector<128x128xf32>
    %cst_10 = arith.constant dense<0.000000e+00> : vector<128x128xf32>
    %26 = tpu.matmul %25, %5, %cst_10 {dimension_numbers = #tpu.dot_dimension_numbers<[1], [0], [0], [1], [0, 0, 1, 1], [], []>} : vector<128x128xf32>, vector<128x128xf32>, vector<128x128xf32> -> vector<128x128xf32>
    %c0_11 = arith.constant 0 : index
    %c0_12 = arith.constant 0 : index
    %c0_13 = arith.constant 0 : index
    %27 = vector.load %arg4[%c0_11, %c0_12, %c0_13] : memref<1x128x128xf32, #tpu.memory_space<vmem>>, vector<1x128x128xf32>
    %28 = vector.shape_cast %27 : vector<1x128x128xf32> to vector<128x128xf32>
    %29 = vector.shape_cast %26 : vector<128x128xf32> to vector<1x128x128xf32>
    tpu.vector_store %arg4[%c0_11, %c0_12, %c0_13], %29 {strides = array<i32>} : memref<1x128x128xf32, #tpu.memory_space<vmem>>, vector<1x128x128xf32>,
    %c0_14 = arith.constant 0 : index
    %c0_15 = arith.constant 0 : index
    %c0_16 = arith.constant 0 : index
    %30 = vector.load %arg5[%c0_14, %c0_15, %c0_16] : memref<1x128x128xf32, #tpu.memory_space<vmem>>, vector<1x128x128xf32>
    %31 = vector.shape_cast %30 : vector<1x128x128xf32> to vector<128x128xf32>
    %32 = vector.shape_cast %25 : vector<128x128xf32> to vector<1x128x128xf32>
    tpu.vector_store %arg5[%c0_14, %c0_15, %c0_16], %32 {strides = array<i32>} : memref<1x128x128xf32, #tpu.memory_space<vmem>>, vector<1x128x128xf32>,
    return
  }
  func.func @transform_0(%arg0: i32, %arg1: i32) -> (i32, i32, i32) {
    %c0_i32 = arith.constant 0 : i32
    %c0_i32_0 = arith.constant 0 : i32
    return %arg0, %arg1, %c0_i32 : i32, i32, i32
  }
  func.func @transform_1(%arg0: i32, %arg1: i32) -> (i32, i32, i32) {
    %c0_i32 = arith.constant 0 : i32
    %c0_i32_0 = arith.constant 0 : i32
    %c0_i32_1 = arith.constant 0 : i32
    return %arg0, %c0_i32, %c0_i32_0 : i32, i32, i32
  }
  func.func @transform_2(%arg0: i32, %arg1: i32) -> (i32, i32, i32) {
    %c0_i32 = arith.constant 0 : i32
    %c0_i32_0 = arith.constant 0 : i32
    return %arg0, %arg1, %c0_i32 : i32, i32, i32
  }
  func.func @transform_3(%arg0: i32, %arg1: i32) -> (i32, i32, i32) {
    %c0_i32 = arith.constant 0 : i32
    %c0_i32_0 = arith.constant 0 : i32
    return %arg0, %arg1, %c0_i32 : i32, i32, i32
  }
}

</mosaic_0001>

<llo_original>
// kernel: tpu_custom_call.1
$region0: #{tpu_custom_call.1}
  #allocation0 [shape = 'u32[]', space=smem, size = 0x4, offset = 0x4, fixed_abs, tag = 'smem constant byte address 0x4 - core index']
  #allocation1 [shape = 'u32[72,128]{1,0:T(1,128)}', space=vmem, size = 0x9000, scoped, tag = 'internal scratch']
  %s0 = inlined_call_operand.hbm [shape: f32[2,128,128], index: 0, kind: input, shape index: {}]
  %s1 = inlined_call_operand.hbm [shape: f32[2,128,128], index: 1, kind: input, shape index: {}]
  %s2 = inlined_call_operand.hbm [shape: f32[2,128,128], index: 2, kind: output, shape index: {0}]
  %s3 = inlined_call_operand.hbm [shape: f32[2,128,128], index: 3, kind: output, shape index: {1}]
  %4 = xla_tuple %s2, %s3
  %s5 = sld [smem:[#allocation0]]
  $region57: #{tpu_custom_call.1} parent=0
    _
  %s7 = ssub.s32 1, %s5
  %s8 = scalar_select 0, %s7, %s5
  $region1: #{tpu_custom_call.1} parent=0
    #allocation2 [shape = 'u8[131072]{0}', space=vmem, size = 0x20000, scoped, tag = 'input window, operand 0']
    #allocation3 [shape = 's32[2]{0}', space=sflag, size = 0x8, scoped, tag = 'scoped memory for tpu_custom_call.1']
    #allocation4 [shape = 's32[2]{0}', space=sflag, size = 0x8, scoped, tag = 'scoped memory for tpu_custom_call.1']
    #allocation5 [shape = 'u8[131072]{0}', space=vmem, size = 0x20000, scoped, tag = 'input window, operand 1']
    #allocation6 [shape = 's32[2]{0}', space=sflag, size = 0x8, scoped, tag = 'scoped memory for tpu_custom_call.1']
    #allocation7 [shape = 'u8[131072]{0}', space=vmem, size = 0x20000, scoped, tag = 'output window, operand 0']
    #allocation8 [shape = 'u8[131072]{0}', space=vmem, size = 0x20000, scoped, tag = 'output window, operand 1']
    #allocation9 [shape = 's32[2]{0}', space=sflag, size = 0x8, scoped, tag = 'scoped memory for tpu_custom_call.1']
    %9 = vsyncpa [#allocation3], 0
    %s10 = scalar_lea.sflag [#allocation3], 1
    %11 = vsyncpa %s10, 0
    %12 = vsyncpa [#allocation6], 0
    %s13 = scalar_lea.sflag [#allocation6], 1
    %14 = vsyncpa %s13, 0
    %15 = vsyncpa [#allocation4], 0
    %s16 = scalar_lea.sflag [#allocation4], 1
    %17 = vsyncpa %s16, 0
    %18 = vsyncpa [#allocation9], 0
    %s19 = scalar_lea.sflag [#allocation9], 1
    %20 = vsyncpa %s19, 0
    loop: start=0, step=1, limit=4
    $region2: #{tpu_custom_call.1} parent=1 // loop_pre_header
      _
    $region3: #{tpu_custom_call.1} parent=1 // loop_header
      %s22 = sphi 0, %s26
      %p23 = scmp.ge.s32.totalorder %s22, 4
      %s29 = sphi 0, %s41
      %s30 = sphi 0, %s37
      %s31 = sphi 0, %s29
      %s32 = sphi 0, %s30
      %s33 = sphi 0, %s31
      %s34 = sphi 0, %s32
      %s46 = sphi 0, %s48
      %s49 = sphi 0, %s46
      %s50 = sphi 0, %s49
      %s66 = sphi 0, %s50
      %s72 = sphi 0, %s74
      %s75 = sphi 0, %s72
      %s76 = sphi 0, %s75
      %s92 = sphi 0, %s76
      %s100 = sphi 0, %s102
      %s103 = sphi 0, %s100
      %s104 = sphi 0, %s103
      %s120 = sphi 0, %s104
      %s128 = sphi 0, %s130
      %s131 = sphi 0, %s128
      %s132 = sphi 0, %s131
      %s148 = sphi 0, %s132
    $region4: #{tpu_custom_call.1} parent=1 // loop_header_branch
      %25 = sbr.rel (%p23) target = $region8
    $region5: #{tpu_custom_call.1} parent=1 // loop_body
      %s27 = ssub.s32 %s22, 1
      %s28 = ssub.s32 %s22, 2
      %s35 = sadd.s32 1, %s30
      %p36 = scmp.ge.s32.totalorder %s35, 1
      %s37 = scalar_select %p36, 0, %s35
      %s38 = sadd.s32 1, %s29
      %s39 = scalar_select %p36, %s38, %s29
      %p40 = scmp.ge.s32.totalorder %s39, 2
      %s41 = scalar_select %p40, 0, %s39
      %s42 = ssub.s32 %s29, %s41
      %s43 = ssub.s32 %s30, %s37
      %s44 = sor.u32 %s42, %s43
      %p45 = scmp.eq.s32.totalorder %s44, 0
      %s47 = sadd.s32 %s46, 1
      %s48 = scalar_select %p45, %s46, %s47
      %p51 = pneg %p45
      %p52 = scmp.eq.s32.totalorder %s22, 1
      %p53 = por %p51, %p52
      %p54 = scmp.ne.s32.totalorder %s46, %s49
      %p55 = scmp.eq.s32.totalorder %s22, 0
      %p56 = por %p54, %p55
      %p57 = scmp.ne.s32.totalorder %s46, %s49
      %p58 = scmp.eq.s32.totalorder %s27, 1
      %p59 = por %p57, %p58
      %p60 = scmp.ne.s32.totalorder %s49, %s50
      %p61 = scmp.eq.s32.totalorder %s27, 0
      %p62 = por %p60, %p61
      %p63 = scmp.ne.s32.totalorder %s49, %s50
      %p64 = scmp.eq.s32.totalorder %s28, 1
      %p65 = por %p63, %p64
      %p67 = scmp.ne.s32.totalorder %s50, %s66
      %p68 = scmp.eq.s32.totalorder %s28, 0
      %p69 = por %p67, %p68
      %s70 = ssub.s32 %s29, %s41
      %p71 = scmp.eq.s32.totalorder %s70, 0
      %s73 = sadd.s32 %s72, 1
      %s74 = scalar_select %p71, %s72, %s73
      %p77 = pneg %p71
      %p78 = scmp.eq.s32.totalorder %s22, 1
      %p79 = por %p77, %p78
      %p80 = scmp.ne.s32.totalorder %s72, %s75
      %p81 = scmp.eq.s32.totalorder %s22, 0
      %p82 = por %p80, %p81
      %p83 = scmp.ne.s32.totalorder %s72, %s75
      %p84 = scmp.eq.s32.totalorder %s27, 1
      %p85 = por %p83, %p84
      %p86 = scmp.ne.s32.totalorder %s75, %s76
      %p87 = scmp.eq.s32.totalorder %s27, 0
      %p88 = por %p86, %p87
      %p89 = scmp.ne.s32.totalorder %s75, %s76
      %p90 = scmp.eq.s32.totalorder %s28, 1
      %p91 = por %p89, %p90
      %p93 = scmp.ne.s32.totalorder %s76, %s92
      %p94 = scmp.eq.s32.totalorder %s28, 0
      %p95 = por %p93, %p94
      %s96 = ssub.s32 %s29, %s41
      %s97 = ssub.s32 %s30, %s37
      %s98 = sor.u32 %s96, %s97
      %p99 = scmp.eq.s32.totalorder %s98, 0
      %s101 = sadd.s32 %s100, 1
      %s102 = scalar_select %p99, %s100, %s101
      %p105 = pneg %p99
      %p106 = scmp.eq.s32.totalorder %s22, 1
      %p107 = por %p105, %p106
      %p108 = scmp.ne.s32.totalorder %s100, %s103
      %p109 = scmp.eq.s32.totalorder %s22, 0
      %p110 = por %p108, %p109
      %p111 = scmp.ne.s32.totalorder %s100, %s103
      %p112 = scmp.eq.s32.totalorder %s27, 1
      %p113 = por %p111, %p112
      %p114 = scmp.ne.s32.totalorder %s103, %s104
      %p115 = scmp.eq.s32.totalorder %s27, 0
      %p116 = por %p114, %p115
      %p117 = scmp.ne.s32.totalorder %s103, %s104
      %p118 = scmp.eq.s32.totalorder %s28, 1
      %p119 = por %p117, %p118
      %p121 = scmp.ne.s32.totalorder %s104, %s120
      %p122 = scmp.eq.s32.totalorder %s28, 0
      %p123 = por %p121, %p122
      %s124 = ssub.s32 %s29, %s41
      %s125 = ssub.s32 %s30, %s37
      %s126 = sor.u32 %s124, %s125
      %p127 = scmp.eq.s32.totalorder %s126, 0
      %s129 = sadd.s32 %s128, 1
      %s130 = scalar_select %p127, %s128, %s129
      %p133 = pneg %p127
      %p134 = scmp.eq.s32.totalorder %s22, 1
      %p135 = por %p133, %p134
      %p136 = scmp.ne.s32.totalorder %s128, %s131
      %p137 = scmp.eq.s32.totalorder %s22, 0
      %p138 = por %p136, %p137
      %p139 = scmp.ne.s32.totalorder %s128, %s131
      %p140 = scmp.eq.s32.totalorder %s27, 1
      %p141 = por %p139, %p140
      %p142 = scmp.ne.s32.totalorder %s131, %s132
      %p143 = scmp.eq.s32.totalorder %s27, 0
      %p144 = por %p142, %p143
      %p145 = scmp.ne.s32.totalorder %s131, %s132
      %p146 = scmp.eq.s32.totalorder %s28, 1
      %p147 = por %p145, %p146
      %p149 = scmp.ne.s32.totalorder %s132, %s148
      %p150 = scmp.eq.s32.totalorder %s28, 0
      %p151 = por %p149, %p150
      %p152 = scmp.le.s32.totalorder 1, %s22
      %p153 = scmp.lt.s32.totalorder %s22, 3
      %p154 = pnand %p152, %p153
      %p155 = pneg %p154
      // Predicated region
      $region9: #{tpu_custom_call.1} parent=5 // pred_check
        _
      $region10: #{tpu_custom_call.1} parent=5 // pred_check_branch
        %157 = sbr.rel (%p154) target = $region12
      $region11: #{tpu_custom_call.1} parent=5 // pred_region
        %s158 = ssub.s32 %s22, 1
      $region12: #{tpu_custom_call.1} parent=5 // pred_fallthru
        _
      %p159 = scmp.lt.s32.totalorder %s22, 2
      // Predicated region
      $region13: #{tpu_custom_call.1} parent=5 // pred_check
        %p160 = pneg %p159
      $region14: #{tpu_custom_call.1} parent=5 // pred_check_branch
        %162 = sbr.rel (%p160) target = $region16
      $region15: #{tpu_custom_call.1} parent=5 // pred_region
        // Predicated region
        $region17: #{tpu_custom_call.1} parent=15 // pred_check
          %p163 = pneg %p56
        $region18: #{tpu_custom_call.1} parent=15 // pred_check_branch
          %165 = sbr.rel (%p163) target = $region20
        $region19: #{tpu_custom_call.1} parent=15 // pred_region
          %s166 = sand.u32 %s46, 1
          %s167 = scalar_lea.sflag [#allocation3], %s166
          %s168 = sand.u32 %s46, 1
          %s169 = smul.addr %s168, 128
          %s170 = scalar_lea.vmem [#allocation2], %s169
          %s171 = smul.u32 16, %s30
          %173 = vsyncadd %s167, 0
          %s174 = smul.addr %s29, 16
          %s175 = sadd.s32 %s171, %s174
          %s176 = smul.addr %s175, 8
          %s177 = scalar_lea.hbm %s0, %s176
          %s178 = sshll.u32 %s177, 4
          %s179 = int_to_ptr.hbm [resolvable:$true] %s178
          %s180 = sshll.u32 %s170, 4
          %s181 = int_to_ptr.vmem [resolvable:$true] %s180
          %186 = dma.hbm_to_vmem [thread:$0]  %s179, 2048, %s181, %s167, 128, 128, 8
        $region20: #{tpu_custom_call.1} parent=15 // pred_fallthru
          _
        // Predicated region
        $region21: #{tpu_custom_call.1} parent=15 // pred_check
          %p187 = pneg %p82
        $region22: #{tpu_custom_call.1} parent=15 // pred_check_branch
          %189 = sbr.rel (%p187) target = $region24
        $region23: #{tpu_custom_call.1} parent=15 // pred_region
          %s190 = sand.u32 %s72, 1
          %s191 = scalar_lea.sflag [#allocation6], %s190
          %s192 = sand.u32 %s72, 1
          %s193 = smul.addr %s192, 128
          %s194 = scalar_lea.vmem [#allocation5], %s193
          %196 = vsyncadd %s191, 0
          %s197 = smul.addr %s29, 16
          %s198 = smul.addr %s197, 8
          %s199 = scalar_lea.hbm %s1, %s198
          %s200 = sshll.u32 %s199, 4
          %s201 = int_to_ptr.hbm [resolvable:$true] %s200
          %s202 = sshll.u32 %s194, 4
          %s203 = int_to_ptr.vmem [resolvable:$true] %s202
          %208 = dma.hbm_to_vmem [thread:$0]  %s201, 2048, %s203, %s191, 128, 128, 8
        $region24: #{tpu_custom_call.1} parent=15 // pred_fallthru
          _
      $region16: #{tpu_custom_call.1} parent=5 // pred_fallthru
        _
      %p209 = scmp.le.s32.totalorder 1, %s22
      %p210 = scmp.lt.s32.totalorder %s22, 3
      %p211 = pnand %p209, %p210
      %p212 = pneg %p211
      // Predicated region
      $region25: #{tpu_custom_call.1} parent=5 // pred_check
        _
      $region26: #{tpu_custom_call.1} parent=5 // pred_check_branch
        %214 = sbr.rel (%p211) target = $region28
      $region27: #{tpu_custom_call.1} parent=5 // pred_region
        %s215 = ssub.s32 %s22, 1
        %s216 = sand.u32 %s49, 1
        %s217 = scalar_lea.sflag [#allocation3], %s216
        %s218 = sand.u32 %s49, 1
        %s219 = smul.addr %s218, 128
        %s220 = scalar_lea.vmem [#allocation2], %s219
        // Predicated region
        $region29: #{tpu_custom_call.1} parent=27 // pred_check
          %p221 = pneg %p62
        $region30: #{tpu_custom_call.1} parent=27 // pred_check_branch
          %223 = sbr.rel (%p221) target = $region32
        $region31: #{tpu_custom_call.1} parent=27 // pred_region
          %225 = dma.done %s217, 2048
        $region32: #{tpu_custom_call.1} parent=27 // pred_fallthru
          _
        %s226 = sand.u32 %s75, 1
        %s227 = scalar_lea.sflag [#allocation6], %s226
        %s228 = sand.u32 %s75, 1
        %s229 = smul.addr %s228, 128
        %s230 = scalar_lea.vmem [#allocation5], %s229
        // Predicated region
        $region33: #{tpu_custom_call.1} parent=27 // pred_check
          %p231 = pneg %p88
        $region34: #{tpu_custom_call.1} parent=27 // pred_check_branch
          %233 = sbr.rel (%p231) target = $region36
        $region35: #{tpu_custom_call.1} parent=27 // pred_region
          %235 = dma.done %s227, 2048
        $region36: #{tpu_custom_call.1} parent=27 // pred_fallthru
          _
        %s236 = sand.u32 %s49, 1
        %s237 = scalar_lea.sflag [#allocation3], %s236
        %s238 = sand.u32 %s49, 1
        %s239 = smul.addr %s238, 128
        %s240 = scalar_lea.vmem [#allocation2], %s239
        %p241 = pneg %p62
        %p242 = pneg %p59
        %s243 = sand.u32 %s75, 1
        %s244 = scalar_lea.sflag [#allocation6], %s243
        %s245 = sand.u32 %s75, 1
        %s246 = smul.addr %s245, 128
        %s247 = scalar_lea.vmem [#allocation5], %s246
        %p248 = pneg %p88
        %p249 = pneg %p85
        %p250 = pneg %p116
        %p251 = pneg %p113
        %s252 = sand.u32 %s103, 1
        %s253 = scalar_lea.sflag [#allocation4], %s252
        %s254 = sand.u32 %s103, 1
        %s255 = smul.addr %s254, 128
        %s256 = scalar_lea.vmem [#allocation7], %s255
        %p257 = pneg %p144
        %p258 = pneg %p141
        %s259 = sand.u32 %s131, 1
        %s260 = scalar_lea.sflag [#allocation9], %s259
        %s261 = sand.u32 %s131, 1
        %s262 = smul.addr %s261, 128
        %s263 = scalar_lea.vmem [#allocation8], %s262
        %s264 = smul.u32 16, %s32
        %s265 = smul.u32 16, %s32
        %s266 = smul.u32 16, %s32
        %v267 = vld [vmem:[%s220] sm:$0xff]
        %v268 = vld [vmem:[%s220 + $0x8] sm:$0xff]
        %v269 = vld [vmem:[%s220 + $0x10] sm:$0xff]
        %v270 = vld [vmem:[%s220 + $0x18] sm:$0xff]
        %v271 = vld [vmem:[%s220 + $0x20] sm:$0xff]
        %v272 = vld [vmem:[%s220 + $0x28] sm:$0xff]
        %v273 = vld [vmem:[%s220 + $0x30] sm:$0xff]
        %v274 = vld [vmem:[%s220 + $0x38] sm:$0xff]
        %v275 = vld [vmem:[%s220 + $0x40] sm:$0xff]
        %v276 = vld [vmem:[%s220 + $0x48] sm:$0xff]
        %v277 = vld [vmem:[%s220 + $0x50] sm:$0xff]
        %v278 = vld [vmem:[%s220 + $0x58] sm:$0xff]
        %v279 = vld [vmem:[%s220 + $0x60] sm:$0xff]
        %v280 = vld [vmem:[%s220 + $0x68] sm:$0xff]
        %v281 = vld [vmem:[%s220 + $0x70] sm:$0xff]
        %v282 = vld [vmem:[%s220 + $0x78] sm:$0xff]
        %v283 = vmul.f32 %v267, 0.17677669
        %v284 = vmul.f32 %v268, 0.17677669
        %v285 = vmul.f32 %v269, 0.17677669
        %v286 = vmul.f32 %v270, 0.17677669
        %v287 = vmul.f32 %v271, 0.17677669
        %v288 = vmul.f32 %v272, 0.17677669
        %v289 = vmul.f32 %v273, 0.17677669
        %v290 = vmul.f32 %v274, 0.17677669
        %v291 = vmul.f32 %v275, 0.17677669
        %v292 = vmul.f32 %v276, 0.17677669
        %v293 = vmul.f32 %v277, 0.17677669
        %v294 = vmul.f32 %v278, 0.17677669
        %v295 = vmul.f32 %v279, 0.17677669
        %v296 = vmul.f32 %v280, 0.17677669
        %v297 = vmul.f32 %v281, 0.17677669
        %v298 = vmul.f32 %v282, 0.17677669
        %v299 = vld [vmem:[%s230] sm:$0xff]
        %v300 = vld [vmem:[%s230 + $0x8] sm:$0xff]
        %v301 = vld [vmem:[%s230 + $0x10] sm:$0xff]
        %v302 = vld [vmem:[%s230 + $0x18] sm:$0xff]
        %v303 = vld [vmem:[%s230 + $0x20] sm:$0xff]
        %v304 = vld [vmem:[%s230 + $0x28] sm:$0xff]
        %v305 = vld [vmem:[%s230 + $0x30] sm:$0xff]
        %v306 = vld [vmem:[%s230 + $0x38] sm:$0xff]
        %v307 = vld [vmem:[%s230 + $0x40] sm:$0xff]
        %v308 = vld [vmem:[%s230 + $0x48] sm:$0xff]
        %v309 = vld [vmem:[%s230 + $0x50] sm:$0xff]
        %v310 = vld [vmem:[%s230 + $0x58] sm:$0xff]
        %v311 = vld [vmem:[%s230 + $0x60] sm:$0xff]
        %v312 = vld [vmem:[%s230 + $0x68] sm:$0xff]
        %v313 = vld [vmem:[%s230 + $0x70] sm:$0xff]
        %v314 = vld [vmem:[%s230 + $0x78] sm:$0xff]
        %315 = vmatpush.xpose.msra.mxu0 %v314
        %316 = vmatpush.xpose.msra.mxu0 %v313
        %317 = vmatpush.xpose.msra.mxu0 %v312
        %318 = vmatpush.xpose.msra.mxu0 %v311
        %319 = vmatpush.xpose.msra.mxu0 %v310
        %320 = vmatpush.xpose.msra.mxu0 %v309
        %321 = vmatpush.xpose.msra.mxu0 %v308
        %322 = vmatpush.xpose.msra.mxu0 %v307
        %323 = vmatpush.xpose.msra.mxu0 %v306
        %324 = vmatpush.xpose.msra.mxu0 %v305
        %325 = vmatpush.xpose.msra.mxu0 %v304
        %326 = vmatpush.xpose.msra.mxu0 %v303
        %327 = vmatpush.xpose.msra.mxu0 %v302
        %328 = vmatpush.xpose.msra.mxu0 %v301
        %329 = vmatpush.xpose.msra.mxu0 %v300
        %330 = vmatpush.xpose.msra.mxu0 %v299
        %331 = vmatmul.f32.gmra.mxu0 %v283
        %v332 = vpop.f32.mrf.mxu0
        %v333 = vadd.f32 0.0, %v332
        %334 = vmatmul.f32.gmra.mxu0 %v284
        %v335 = vpop.f32.mrf.mxu0
        %v336 = vadd.f32 0.0, %v335
        %337 = vmatmul.f32.gmra.mxu0 %v285
        %v338 = vpop.f32.mrf.mxu0
        %v339 = vadd.f32 0.0, %v338
        %340 = vmatmul.f32.gmra.mxu0 %v286
        %v341 = vpop.f32.mrf.mxu0
        %v342 = vadd.f32 0.0, %v341
        %343 = vmatmul.f32.gmra.mxu0 %v287
        %v344 = vpop.f32.mrf.mxu0
        %v345 = vadd.f32 0.0, %v344
        %346 = vmatmul.f32.gmra.mxu0 %v288
        %v347 = vpop.f32.mrf.mxu0
        %v348 = vadd.f32 0.0, %v347
        %349 = vmatmul.f32.gmra.mxu0 %v289
        %v350 = vpop.f32.mrf.mxu0
        %v351 = vadd.f32 0.0, %v350
        %352 = vmatmul.f32.gmra.mxu0 %v290
        %v353 = vpop.f32.mrf.mxu0
        %v354 = vadd.f32 0.0, %v353
        %355 = vmatmul.f32.gmra.mxu0 %v291
        %v356 = vpop.f32.mrf.mxu0
        %v357 = vadd.f32 0.0, %v356
        %358 = vmatmul.f32.gmra.mxu0 %v292
        %v359 = vpop.f32.mrf.mxu0
        %v360 = vadd.f32 0.0, %v359
        %361 = vmatmul.f32.gmra.mxu0 %v293
        %v362 = vpop.f32.mrf.mxu0
        %v363 = vadd.f32 0.0, %v362
        %364 = vmatmul.f32.gmra.mxu0 %v294
        %v365 = vpop.f32.mrf.mxu0
        %v366 = vadd.f32 0.0, %v365
        %367 = vmatmul.f32.gmra.mxu0 %v295
        %v368 = vpop.f32.mrf.mxu0
        %v369 = vadd.f32 0.0, %v368
        %370 = vmatmul.f32.gmra.mxu0 %v296
        %v371 = vpop.f32.mrf.mxu0
        %v372 = vadd.f32 0.0, %v371
        %373 = vmatmul.f32.gmra.mxu0 %v297
        %v374 = vpop.f32.mrf.mxu0
        %v375 = vadd.f32 0.0, %v374
        %376 = vmatmul.f32.gmra.mxu0 %v298
        %v377 = vpop.f32.mrf.mxu0
        %v378 = vadd.f32 0.0, %v377
        %379 = vdwg.mxu0
        %v380 = vlaneseq
        %v381 = vand.u32 %v380, 127
        %vm382 = vcmp.lt.s32.totalorder %v381, 8
        %v383 = vsel %vm382, %v333, -1e+30
        %v384 = vsel %vm382, %v336, -1e+30
        %v385 = vsel %vm382, %v339, -1e+30
        %v386 = vsel %vm382, %v342, -1e+30
        %v387 = vsel %vm382, %v345, -1e+30
        %v388 = vsel %vm382, %v348, -1e+30
        %v389 = vsel %vm382, %v351, -1e+30
        %v390 = vsel %vm382, %v354, -1e+30
        %v391 = vsel %vm382, %v357, -1e+30
        %v392 = vsel %vm382, %v360, -1e+30
        %v393 = vsel %vm382, %v363, -1e+30
        %v394 = vsel %vm382, %v366, -1e+30
        %v395 = vsel %vm382, %v369, -1e+30
        %v396 = vsel %vm382, %v372, -1e+30
        %v397 = vsel %vm382, %v375, -1e+30
        %v398 = vsel %vm382, %v378, -1e+30
        %399 = vmax.xlane.f32.xlu0 %v383
        %v400 = vpop.xlane.xlu0 %399
        %401 = vmax.xlane.f32.xlu0 %v384
        %v402 = vpop.xlane.xlu0 %401
        %403 = vmax.xlane.f32.xlu0 %v385
        %v404 = vpop.xlane.xlu0 %403
        %405 = vmax.xlane.f32.xlu0 %v386
        %v406 = vpop.xlane.xlu0 %405
        %407 = vmax.xlane.f32.xlu0 %v387
        %v408 = vpop.xlane.xlu0 %407
        %409 = vmax.xlane.f32.xlu0 %v388
        %v410 = vpop.xlane.xlu0 %409
        %411 = vmax.xlane.f32.xlu0 %v389
        %v412 = vpop.xlane.xlu0 %411
        %413 = vmax.xlane.f32.xlu0 %v390
        %v414 = vpop.xlane.xlu0 %413
        %415 = vmax.xlane.f32.xlu0 %v391
        %v416 = vpop.xlane.xlu0 %415
        %417 = vmax.xlane.f32.xlu0 %v392
        %v418 = vpop.xlane.xlu0 %417
        %419 = vmax.xlane.f32.xlu0 %v393
        %v420 = vpop.xlane.xlu0 %419
        %421 = vmax.xlane.f32.xlu0 %v394
        %v422 = vpop.xlane.xlu0 %421
        %423 = vmax.xlane.f32.xlu0 %v395
        %v424 = vpop.xlane.xlu0 %423
        %425 = vmax.xlane.f32.xlu0 %v396
        %v426 = vpop.xlane.xlu0 %425
        %427 = vmax.xlane.f32.xlu0 %v397
        %v428 = vpop.xlane.xlu0 %427
        %429 = vmax.xlane.f32.xlu0 %v398
        %v430 = vpop.xlane.xlu0 %429
        %v431 = vsub.f32 %v383, %v400
        %v432 = vsub.f32 %v384, %v402
        %v433 = vsub.f32 %v385, %v404
        %v434 = vsub.f32 %v386, %v406
        %v435 = vsub.f32 %v387, %v408
        %v436 = vsub.f32 %v388, %v410
        %v437 = vsub.f32 %v389, %v412
        %v438 = vsub.f32 %v390, %v414
        %v439 = vsub.f32 %v391, %v416
        %v440 = vsub.f32 %v392, %v418
        %v441 = vsub.f32 %v393, %v420
        %v442 = vsub.f32 %v394, %v422
        %v443 = vsub.f32 %v395, %v424
        %v444 = vsub.f32 %v396, %v426
        %v445 = vsub.f32 %v397, %v428
        %v446 = vsub.f32 %v398, %v430
        %v447 = vmul.f32 %v431, 1.442695
        %v448 = vpow.pop %v447
        %v449 = vmul.f32 %v432, 1.442695
        %v450 = vpow.pop %v449
        %v451 = vmul.f32 %v433, 1.442695
        %v452 = vpow.pop %v451
        %v453 = vmul.f32 %v434, 1.442695
        %v454 = vpow.pop %v453
        %v455 = vmul.f32 %v435, 1.442695
        %v456 = vpow.pop %v455
        %v457 = vmul.f32 %v436, 1.442695
        %v458 = vpow.pop %v457
        %v459 = vmul.f32 %v437, 1.442695
        %v460 = vpow.pop %v459
        %v461 = vmul.f32 %v438, 1.442695
        %v462 = vpow.pop %v461
        %v463 = vmul.f32 %v439, 1.442695
        %v464 = vpow.pop %v463
        %v465 = vmul.f32 %v440, 1.442695
        %v466 = vpow.pop %v465
        %v467 = vmul.f32 %v441, 1.442695
        %v468 = vpow.pop %v467
        %v469 = vmul.f32 %v442, 1.442695
        %v470 = vpow.pop %v469
        %v471 = vmul.f32 %v443, 1.442695
        %v472 = vpow.pop %v471
        %v473 = vmul.f32 %v444, 1.442695
        %v474 = vpow.pop %v473
        %v475 = vmul.f32 %v445, 1.442695
        %v476 = vpow.pop %v475
        %v477 = vmul.f32 %v446, 1.442695
        %v478 = vpow.pop %v477
        %479 = vadd.xlane.f32.xlu0 %v448
        %v480 = vpop.xlane.xlu0 %479
        %481 = vadd.xlane.f32.xlu0 %v450
        %v482 = vpop.xlane.xlu0 %481
        %483 = vadd.xlane.f32.xlu0 %v452
        %v484 = vpop.xlane.xlu0 %483
        %485 = vadd.xlane.f32.xlu0 %v454
        %v486 = vpop.xlane.xlu0 %485
        %487 = vadd.xlane.f32.xlu0 %v456
        %v488 = vpop.xlane.xlu0 %487
        %489 = vadd.xlane.f32.xlu0 %v458
        %v490 = vpop.xlane.xlu0 %489
        %491 = vadd.xlane.f32.xlu0 %v460
        %v492 = vpop.xlane.xlu0 %491
        %493 = vadd.xlane.f32.xlu0 %v462
        %v494 = vpop.xlane.xlu0 %493
        %495 = vadd.xlane.f32.xlu0 %v464
        %v496 = vpop.xlane.xlu0 %495
        %497 = vadd.xlane.f32.xlu0 %v466
        %v498 = vpop.xlane.xlu0 %497
        %499 = vadd.xlane.f32.xlu0 %v468
        %v500 = vpop.xlane.xlu0 %499
        %501 = vadd.xlane.f32.xlu0 %v470
        %v502 = vpop.xlane.xlu0 %501
        %503 = vadd.xlane.f32.xlu0 %v472
        %v504 = vpop.xlane.xlu0 %503
        %505 = vadd.xlane.f32.xlu0 %v474
        %v506 = vpop.xlane.xlu0 %505
        %507 = vadd.xlane.f32.xlu0 %v476
        %v508 = vpop.xlane.xlu0 %507
        %509 = vadd.xlane.f32.xlu0 %v478
        %v510 = vpop.xlane.xlu0 %509
        %v511 = vrcp.pop %v480
        %v512 = vrcp.pop %v482
        %v513 = vrcp.pop %v484
        %v514 = vrcp.pop %v486
        %v515 = vrcp.pop %v488
        %v516 = vrcp.pop %v490
        %v517 = vrcp.pop %v492
        %v518 = vrcp.pop %v494
        %v519 = vrcp.pop %v496
        %v520 = vrcp.pop %v498
        %v521 = vrcp.pop %v500
        %v522 = vrcp.pop %v502
        %v523 = vrcp.pop %v504
        %v524 = vrcp.pop %v506
        %v525 = vrcp.pop %v508
        %v526 = vrcp.pop %v510
        %v527 = vmul.f32 %v480, %v511
        %v528 = vmul.f32 %v482, %v512
        %v529 = vmul.f32 %v484, %v513
        %v530 = vmul.f32 %v486, %v514
        %v531 = vmul.f32 %v488, %v515
        %v532 = vmul.f32 %v490, %v516
        %v533 = vmul.f32 %v492, %v517
        %v534 = vmul.f32 %v494, %v518
        %v535 = vmul.f32 %v496, %v519
        %v536 = vmul.f32 %v498, %v520
        %v537 = vmul.f32 %v500, %v521
        %v538 = vmul.f32 %v502, %v522
        %v539 = vmul.f32 %v504, %v523
        %v540 = vmul.f32 %v506, %v524
        %v541 = vmul.f32 %v508, %v525
        %v542 = vmul.f32 %v510, %v526
        %v543 = vsub.f32 2.0, %v527
        %v544 = vsub.f32 2.0, %v528
        %v545 = vsub.f32 2.0, %v529
        %v546 = vsub.f32 2.0, %v530
        %v547 = vsub.f32 2.0, %v531
        %v548 = vsub.f32 2.0, %v532
        %v549 = vsub.f32 2.0, %v533
        %v550 = vsub.f32 2.0, %v534
        %v551 = vsub.f32 2.0, %v535
        %v552 = vsub.f32 2.0, %v536
        %v553 = vsub.f32 2.0, %v537
        %v554 = vsub.f32 2.0, %v538
        %v555 = vsub.f32 2.0, %v539
        %v556 = vsub.f32 2.0, %v540
        %v557 = vsub.f32 2.0, %v541
        %v558 = vsub.f32 2.0, %v542
        %v559 = vmul.f32 %v511, %v543
        %v560 = vmul.f32 %v512, %v544
        %v561 = vmul.f32 %v513, %v545
        %v562 = vmul.f32 %v514, %v546
        %v563 = vmul.f32 %v515, %v547
        %v564 = vmul.f32 %v516, %v548
        %v565 = vmul.f32 %v517, %v549
        %v566 = vmul.f32 %v518, %v550
        %v567 = vmul.f32 %v519, %v551
        %v568 = vmul.f32 %v520, %v552
        %v569 = vmul.f32 %v521, %v553
        %v570 = vmul.f32 %v522, %v554
        %v571 = vmul.f32 %v523, %v555
        %v572 = vmul.f32 %v524, %v556
        %v573 = vmul.f32 %v525, %v557
        %v574 = vmul.f32 %v526, %v558
        %v575 = vmul.f32 %v448, %v559
        %v576 = vmul.f32 %v450, %v560
        %v577 = vmul.f32 %v452, %v561
        %v578 = vmul.f32 %v454, %v562
        %v579 = vmul.f32 %v456, %v563
        %v580 = vmul.f32 %v458, %v564
        %v581 = vmul.f32 %v460, %v565
        %v582 = vmul.f32 %v462, %v566
        %v583 = vmul.f32 %v464, %v567
        %v584 = vmul.f32 %v466, %v568
        %v585 = vmul.f32 %v468, %v569
        %v586 = vmul.f32 %v470, %v570
        %v587 = vmul.f32 %v472, %v571
        %v588 = vmul.f32 %v474, %v572
        %v589 = vmul.f32 %v476, %v573
        %v590 = vmul.f32 %v478, %v574
        %591 = vmatpush.msra.mxu0 %v314
        %592 = vmatpush.msra.mxu0 %v313
        %593 = vmatpush.msra.mxu0 %v312
        %594 = vmatpush.msra.mxu0 %v311
        %595 = vmatpush.msra.mxu0 %v310
        %596 = vmatpush.msra.mxu0 %v309
        %597 = vmatpush.msra.mxu0 %v308
        %598 = vmatpush.msra.mxu0 %v307
        %599 = vmatpush.msra.mxu0 %v306
        %600 = vmatpush.msra.mxu0 %v305
        %601 = vmatpush.msra.mxu0 %v304
        %602 = vmatpush.msra.mxu0 %v303
        %603 = vmatpush.msra.mxu0 %v302
        %604 = vmatpush.msra.mxu0 %v301
        %605 = vmatpush.msra.mxu0 %v300
        %606 = vmatpush.msra.mxu0 %v299
        %607 = vmatmul.f32.gmra.mxu0 %v575
        %v608 = vpop.f32.mrf.mxu0
        %v609 = vadd.f32 0.0, %v608
        %610 = vmatmul.f32.gmra.mxu0 %v576
        %v611 = vpop.f32.mrf.mxu0
        %v612 = vadd.f32 0.0, %v611
        %613 = vmatmul.f32.gmra.mxu0 %v577
        %v614 = vpop.f32.mrf.mxu0
        %v615 = vadd.f32 0.0, %v614
        %616 = vmatmul.f32.gmra.mxu0 %v578
        %v617 = vpop.f32.mrf.mxu0
        %v618 = vadd.f32 0.0, %v617
        %619 = vmatmul.f32.gmra.mxu0 %v579
        %v620 = vpop.f32.mrf.mxu0
        %v621 = vadd.f32 0.0, %v620
        %622 = vmatmul.f32.gmra.mxu0 %v580
        %v623 = vpop.f32.mrf.mxu0
        %v624 = vadd.f32 0.0, %v623
        %625 = vmatmul.f32.gmra.mxu0 %v581
        %v626 = vpop.f32.mrf.mxu0
        %v627 = vadd.f32 0.0, %v626
        %628 = vmatmul.f32.gmra.mxu0 %v582
        %v629 = vpop.f32.mrf.mxu0
        %v630 = vadd.f32 0.0, %v629
        %631 = vmatmul.f32.gmra.mxu0 %v583
        %v632 = vpop.f32.mrf.mxu0
        %v633 = vadd.f32 0.0, %v632
        %634 = vmatmul.f32.gmra.mxu0 %v584
        %v635 = vpop.f32.mrf.mxu0
        %v636 = vadd.f32 0.0, %v635
        %637 = vmatmul.f32.gmra.mxu0 %v585
        %v638 = vpop.f32.mrf.mxu0
        %v639 = vadd.f32 0.0, %v638
        %640 = vmatmul.f32.gmra.mxu0 %v586
        %v641 = vpop.f32.mrf.mxu0
        %v642 = vadd.f32 0.0, %v641
        %643 = vmatmul.f32.gmra.mxu0 %v587
        %v644 = vpop.f32.mrf.mxu0
        %v645 = vadd.f32 0.0, %v644
        %646 = vmatmul.f32.gmra.mxu0 %v588
        %v647 = vpop.f32.mrf.mxu0
        %v648 = vadd.f32 0.0, %v647
        %649 = vmatmul.f32.gmra.mxu0 %v589
        %v650 = vpop.f32.mrf.mxu0
        %v651 = vadd.f32 0.0, %v650
        %652 = vmatmul.f32.gmra.mxu0 %v590
        %v653 = vpop.f32.mrf.mxu0
        %v654 = vadd.f32 0.0, %v653
        %655 = vdwg.mxu0
        %656 = vst [vmem:[%s256] sm:$0xff] %v609
        %657 = vst [vmem:[%s256 + $0x8] sm:$0xff] %v612
        %658 = vst [vmem:[%s256 + $0x10] sm:$0xff] %v615
        %659 = vst [vmem:[%s256 + $0x18] sm:$0xff] %v618
        %660 = vst [vmem:[%s256 + $0x20] sm:$0xff] %v621
        %661 = vst [vmem:[%s256 + $0x28] sm:$0xff] %v624
        %662 = vst [vmem:[%s256 + $0x30] sm:$0xff] %v627
        %663 = vst [vmem:[%s256 + $0x38] sm:$0xff] %v630
        %664 = vst [vmem:[%s256 + $0x40] sm:$0xff] %v633
        %665 = vst [vmem:[%s256 + $0x48] sm:$0xff] %v636
        %666 = vst [vmem:[%s256 + $0x50] sm:$0xff] %v639
        %667 = vst [vmem:[%s256 + $0x58] sm:$0xff] %v642
        %668 = vst [vmem:[%s256 + $0x60] sm:$0xff] %v645
        %669 = vst [vmem:[%s256 + $0x68] sm:$0xff] %v648
        %670 = vst [vmem:[%s256 + $0x70] sm:$0xff] %v651
        %671 = vst [vmem:[%s256 + $0x78] sm:$0xff] %v654
        %672 = vst [vmem:[%s263] sm:$0xff] %v575
        %673 = vst [vmem:[%s263 + $0x8] sm:$0xff] %v576
        %674 = vst [vmem:[%s263 + $0x10] sm:$0xff] %v577
        %675 = vst [vmem:[%s263 + $0x18] sm:$0xff] %v578
        %676 = vst [vmem:[%s263 + $0x20] sm:$0xff] %v579
        %677 = vst [vmem:[%s263 + $0x28] sm:$0xff] %v580
        %678 = vst [vmem:[%s263 + $0x30] sm:$0xff] %v581
        %679 = vst [vmem:[%s263 + $0x38] sm:$0xff] %v582
        %680 = vst [vmem:[%s263 + $0x40] sm:$0xff] %v583
        %681 = vst [vmem:[%s263 + $0x48] sm:$0xff] %v584
        %682 = vst [vmem:[%s263 + $0x50] sm:$0xff] %v585
        %683 = vst [vmem:[%s263 + $0x58] sm:$0xff] %v586
        %684 = vst [vmem:[%s263 + $0x60] sm:$0xff] %v587
        %685 = vst [vmem:[%s263 + $0x68] sm:$0xff] %v588
        %686 = vst [vmem:[%s263 + $0x70] sm:$0xff] %v589
        %687 = vst [vmem:[%s263 + $0x78] sm:$0xff] %v590
        %s688 = sand.u32 %s103, 1
        %s689 = scalar_lea.sflag [#allocation4], %s688
        %s690 = sand.u32 %s103, 1
        %s691 = smul.addr %s690, 128
        %s692 = scalar_lea.vmem [#allocation7], %s691
        %s693 = sand.u32 %s131, 1
        %s694 = scalar_lea.sflag [#allocation9], %s693
        %s695 = sand.u32 %s131, 1
        %s696 = smul.addr %s695, 128
        %s697 = scalar_lea.vmem [#allocation8], %s696
        // Predicated region
        $region37: #{tpu_custom_call.1} parent=27 // pred_check
          %p698 = pneg %p113
        $region38: #{tpu_custom_call.1} parent=27 // pred_check_branch
          %700 = sbr.rel (%p698) target = $region40
        $region39: #{tpu_custom_call.1} parent=27 // pred_region
          %s701 = smul.u32 16, %s32
          %703 = vsyncadd %s689, 0
          %s704 = smul.addr %s31, 16
          %s705 = sadd.s32 %s701, %s704
          %s706 = smul.addr %s705, 8
          %s707 = scalar_lea.hbm %s2, %s706
          %s708 = sshll.u32 %s692, 4
          %s709 = int_to_ptr.vmem [resolvable:$true] %s708
          %s710 = sshll.u32 %s707, 4
          %s711 = int_to_ptr.hbm [resolvable:$true] %s710
          %716 = dma.vmem_to_hbm [thread:$0]  %s709, 2048, %s711, %s689, 128, 128, 8
        $region40: #{tpu_custom_call.1} parent=27 // pred_fallthru
          _
        // Predicated region
        $region41: #{tpu_custom_call.1} parent=27 // pred_check
          %p717 = pneg %p141
        $region42: #{tpu_custom_call.1} parent=27 // pred_check_branch
          %719 = sbr.rel (%p717) target = $region44
        $region43: #{tpu_custom_call.1} parent=27 // pred_region
          %s720 = smul.u32 16, %s32
          %722 = vsyncadd %s694, 0
          %s723 = smul.addr %s31, 16
          %s724 = sadd.s32 %s720, %s723
          %s725 = smul.addr %s724, 8
          %s726 = scalar_lea.hbm %s3, %s725
          %s727 = sshll.u32 %s697, 4
          %s728 = int_to_ptr.vmem [resolvable:$true] %s727
          %s729 = sshll.u32 %s726, 4
          %s730 = int_to_ptr.hbm [resolvable:$true] %s729
          %735 = dma.vmem_to_hbm [thread:$0]  %s728, 2048, %s730, %s694, 128, 128, 8
        $region44: #{tpu_custom_call.1} parent=27 // pred_fallthru
          _
      $region28: #{tpu_custom_call.1} parent=5 // pred_fallthru
        _
      %p736 = scmp.le.s32.totalorder 2, %s22
      // Predicated region
      $region45: #{tpu_custom_call.1} parent=5 // pred_check
        %p737 = pneg %p736
      $region46: #{tpu_custom_call.1} parent=5 // pred_check_branch
        %739 = sbr.rel (%p737) target = $region48
      $region47: #{tpu_custom_call.1} parent=5 // pred_region
        %s740 = ssub.s32 %s22, 2
        // Predicated region
        $region49: #{tpu_custom_call.1} parent=47 // pred_check
          %p741 = pneg %p119
        $region50: #{tpu_custom_call.1} parent=47 // pred_check_branch
          %743 = sbr.rel (%p741) target = $region52
        $region51: #{tpu_custom_call.1} parent=47 // pred_region
          %s744 = sand.u32 %s104, 1
          %s745 = scalar_lea.sflag [#allocation4], %s744
          %s746 = sand.u32 %s104, 1
          %s747 = smul.addr %s746, 128
          %s748 = scalar_lea.vmem [#allocation7], %s747
          %750 = dma.done %s745, 2048
        $region52: #{tpu_custom_call.1} parent=47 // pred_fallthru
          _
        // Predicated region
        $region53: #{tpu_custom_call.1} parent=47 // pred_check
          %p751 = pneg %p147
        $region54: #{tpu_custom_call.1} parent=47 // pred_check_branch
          %753 = sbr.rel (%p751) target = $region56
        $region55: #{tpu_custom_call.1} parent=47 // pred_region
          %s754 = sand.u32 %s132, 1
          %s755 = scalar_lea.sflag [#allocation9], %s754
          %s756 = sand.u32 %s132, 1
          %s757 = smul.addr %s756, 128
          %s758 = scalar_lea.vmem [#allocation8], %s757
          %760 = dma.done %s755, 2048
        $region56: #{tpu_custom_call.1} parent=47 // pred_fallthru
          _
      $region48: #{tpu_custom_call.1} parent=5 // pred_fallthru
        _
    $region6: #{tpu_custom_call.1} parent=1 // loop_footer
      %s26 = sadd.s32 1, %s22
    $region7: #{tpu_custom_call.1} parent=1 // loop_footer_branch
      %21 = sbr.rel target = $region3
    $region8: #{tpu_custom_call.1} parent=1 // loop_exit
      _
    %761 = vsyncpa [#allocation3], 1
    %s762 = scalar_lea.sflag [#allocation3], 1
    %763 = vsyncpa %s762, 1
    %764 = vsyncpa [#allocation6], 1
    %s765 = scalar_lea.sflag [#allocation6], 1
    %766 = vsyncpa %s765, 1
    %767 = vsyncpa [#allocation4], 1
    %s768 = scalar_lea.sflag [#allocation4], 1
    %769 = vsyncpa %s768, 1
    %770 = vsyncpa [#allocation9], 1
    %s771 = scalar_lea.sflag [#allocation9], 1
    %772 = vsyncpa %s771, 1

</llo_original>
